<compile_context>
chip_gen: v6e
topology: v6e:2x2x1
jax: 0.10.0
libtpu: 0.0.40
codegen_flags: <defaults>
</compile_context>

<pallas_src>
import functools
import math

import jax
import jax.numpy as jnp
from jax.experimental import pallas as pl
from jax.experimental.pallas import tpu as pltpu


def _round_up(x, m):
    return ((x + m - 1) // m) * m


def _matmul_bias_act_kernel(a_ref, b_ref, bias_ref, o_ref, acc_ref, *, relu):
    k = pl.program_id(2)

    @pl.when(k == 0)
    def _():
        acc_ref[...] = jnp.zeros_like(acc_ref)

    acc_ref[...] += jnp.dot(a_ref[...], b_ref[...],
                            preferred_element_type=jnp.float32)

    @pl.when(k == pl.num_programs(2) - 1)
    def _():
        r = acc_ref[...] + bias_ref[...]          # bias is zeros when absent
        if relu:
            r = jnp.maximum(r, 0.0)
        o_ref[...] = r.astype(o_ref.dtype)


def matmul_bias_act(a, b, bias=None, relu=False, *, tm=256, tn=256, tk=256):
    """act(a @ b + bias) as a tiled Pallas TPU matmul with fused epilogue."""
    M, K = a.shape
    Kb, N = b.shape
    assert K == Kb, (a.shape, b.shape)

    # Lane-dense / sublane-aligned padding.
    Mp = _round_up(M, 8)
    Kp = _round_up(K, 128)
    Np = _round_up(N, 128)
    tm = min(tm, Mp)
    tk = min(tk, Kp)
    tn = min(tn, Np)
    Mp = _round_up(Mp, tm)
    Kp = _round_up(Kp, tk)
    Np = _round_up(Np, tn)

    a_p = jnp.pad(a, ((0, Mp - M), (0, Kp - K)))
    b_p = jnp.pad(b, ((0, Kp - K), (0, Np - N)))
    if bias is None:
        bias_p = jnp.zeros((1, Np), dtype=jnp.float32)
    else:
        bias_p = jnp.pad(bias.reshape(1, -1).astype(jnp.float32),
                         ((0, 0), (0, Np - N)))

    grid = (Mp // tm, Np // tn, Kp // tk)

    out_p = pl.pallas_call(
        functools.partial(_matmul_bias_act_kernel, relu=relu),
        out_shape=jax.ShapeDtypeStruct((Mp, Np), a.dtype),
        grid_spec=pltpu.PrefetchScalarGridSpec(
            num_scalar_prefetch=0,
            grid=grid,
            in_specs=[
                pl.BlockSpec((tm, tk), lambda i, j, k: (i, k)),
                pl.BlockSpec((tk, tn), lambda i, j, k: (k, j)),
                pl.BlockSpec((1, tn), lambda i, j, k: (0, j)),
            ],
            out_specs=pl.BlockSpec((tm, tn), lambda i, j, k: (i, j)),
            scratch_shapes=[pltpu.VMEM((tm, tn), jnp.float32)],
        ),
        compiler_params=pltpu.CompilerParams(
            dimension_semantics=("parallel", "parallel", "arbitrary"),
            vmem_limit_bytes=64 * 1024 * 1024,
        ),
    )(a_p, b_p, bias_p)

    return out_p[:M, :N]


def gcn_forward(x, adj, w1, b1, w2, b2):
    """GCN.forward (eval mode): relu(gc1(x, adj)) -> dropout(id) -> gc2(., adj)."""
    # GraphConvolution 1: adj @ (x @ W1) + b1, then ReLU (fused into epilogue).
    xw1 = matmul_bias_act(x, w1)
    h = matmul_bias_act(adj, xw1, bias=b1, relu=True)
    # F.dropout(p, training=False) is identity.
    # TODO(synk): training-mode dropout via pltpu PRNG not implemented.
    # GraphConvolution 2: adj @ (h @ W2) + b2.
    xw2 = matmul_bias_act(h, w2)
    out = matmul_bias_act(adj, xw2, bias=b2)
    return out


if __name__ == "__main__":
    # Small shapes implied by the module: nodes, nfeat, nhid1, nclass.
    N_nodes, nfeat, nhid1, nclass = 64, 32, 16, 8

    key = jax.random.PRNGKey(0)
    kx, ka, kw1, kb1, kw2, kb2 = jax.random.split(key, 6)

    x = jax.random.normal(kx, (N_nodes, nfeat), dtype=jnp.float32)

    # GCN-style row-normalized adjacency (A + I) / rowsum.
    a_raw = (jax.random.uniform(ka, (N_nodes, N_nodes)) < 0.1).astype(jnp.float32)
    a_raw = a_raw + jnp.eye(N_nodes, dtype=jnp.float32)
    adj = a_raw / jnp.sum(a_raw, axis=1, keepdims=True)

    # PyTorch GraphConvolution init: uniform(-1/sqrt(out), 1/sqrt(out)).
    stdv1 = 1.0 / math.sqrt(nhid1)
    w1 = jax.random.uniform(kw1, (nfeat, nhid1), minval=-stdv1, maxval=stdv1,
                            dtype=jnp.float32)
    b1 = jax.random.uniform(kb1, (nhid1,), minval=-stdv1, maxval=stdv1,
                            dtype=jnp.float32)
    stdv2 = 1.0 / math.sqrt(nclass)
    w2 = jax.random.uniform(kw2, (nhid1, nclass), minval=-stdv2, maxval=stdv2,
                            dtype=jnp.float32)
    b2 = jax.random.uniform(kb2, (nclass,), minval=-stdv2, maxval=stdv2,
                            dtype=jnp.float32)

    out = gcn_forward(x, adj, w1, b1, w2, b2)
    jax.block_until_ready(out)

    # Pure-JAX reference of the PyTorch forward (eval mode).
    hp = jax.lax.Precision.HIGHEST
    h_ref = jnp.maximum(
        jnp.dot(adj, jnp.dot(x, w1, precision=hp), precision=hp) + b1, 0.0)
    out_ref = jnp.dot(adj, jnp.dot(h_ref, w2, precision=hp), precision=hp) + b2

    assert out.shape == (N_nodes, nclass)
    assert jnp.allclose(out, out_ref, atol=2e-3, rtol=2e-3), "output mismatch"
    print("KERNEL_OK")
</pallas_src>

<mosaic_0001>
module attributes {stable_mosaic.version = 11 : i64} {
  func.func @_matmul_bias_act_kernel(%arg0: i32, %arg1: i32, %arg2: i32, %arg3: memref<64x128xf32, #tpu.memory_space<vmem>>, %arg4: memref<128x128xf32, #tpu.memory_space<vmem>>, %arg5: memref<1x128xf32, #tpu.memory_space<vmem>>, %arg6: memref<64x128xf32, #tpu.memory_space<vmem>>, %arg7: memref<64x128xf32, #tpu.memory_space<vmem>>) attributes {dimension_semantics = [#tpu.dimension_semantics<parallel>, #tpu.dimension_semantics<parallel>, #tpu.dimension_semantics<arbitrary>], iteration_bounds = array<i64: 1, 1, 1>, scalar_prefetch = 0 : i64, scratch_operands = 1 : i64, tpu.core_type = #tpu.core_type<tc>, window_params = [{transform_indices = @transform_0, window_bounds = array<i64: 64, 128>}, {transform_indices = @transform_1, window_bounds = array<i64: 128, 128>}, {transform_indices = @transform_2, window_bounds = array<i64: 1, 128>}, {transform_indices = @transform_3, window_bounds = array<i64: 64, 128>}]} {
    %c0_i32 = arith.constant 0 : i32
    %0 = arith.cmpi eq, %arg2, %c0_i32 : i32
    %1 = arith.extui %0 : i1 to i32
    %c0_i32_0 = arith.constant 0 : i32
    %2 = arith.cmpi ne, %1, %c0_i32_0 : i32
    scf.if %2 {
      %cst_10 = arith.constant 0.000000e+00 : f32
      %12 = vector.broadcast %cst_10 : f32 to vector<64x128xf32>
      %c0_11 = arith.constant 0 : index
      %c0_12 = arith.constant 0 : index
      %13 = vector.load %arg7[%c0_11, %c0_12] : memref<64x128xf32, #tpu.memory_space<vmem>>, vector<64x128xf32>
      tpu.vector_store %arg7[%c0_11, %c0_12], %12 {strides = array<i32>} : memref<64x128xf32, #tpu.memory_space<vmem>>, vector<64x128xf32>,
    } else {
    }
    %c0 = arith.constant 0 : index
    %c0_1 = arith.constant 0 : index
    %3 = vector.load %arg7[%c0, %c0_1] : memref<64x128xf32, #tpu.memory_space<vmem>>, vector<64x128xf32>
    %c0_2 = arith.constant 0 : index
    %c0_3 = arith.constant 0 : index
    %4 = vector.load %arg3[%c0_2, %c0_3] : memref<64x128xf32, #tpu.memory_space<vmem>>, vector<64x128xf32>
    %c0_4 = arith.constant 0 : index
    %c0_5 = arith.constant 0 : index
    %5 = vector.load %arg4[%c0_4, %c0_5] : memref<128x128xf32, #tpu.memory_space<vmem>>, vector<128x128xf32>
    %cst = arith.constant dense<0.000000e+00> : vector<64x128xf32>
    %6 = tpu.matmul %4, %5, %cst {dimension_numbers = #tpu.dot_dimension_numbers<[1], [0], [0], [1], [0, 0, 1, 1], [], []>} : vector<64x128xf32>, vector<128x128xf32>, vector<64x128xf32> -> vector<64x128xf32>
    %7 = arith.addf %3, %6 : vector<64x128xf32>
    %c0_6 = arith.constant 0 : index
    %c0_7 = arith.constant 0 : index
    %8 = vector.load %arg7[%c0_6, %c0_7] : memref<64x128xf32, #tpu.memory_space<vmem>>, vector<64x128xf32>
    tpu.vector_store %arg7[%c0_6, %c0_7], %7 {strides = array<i32>} : memref<64x128xf32, #tpu.memory_space<vmem>>, vector<64x128xf32>,
    %c0_i32_8 = arith.constant 0 : i32
    %9 = arith.cmpi eq, %arg2, %c0_i32_8 : i32
    %10 = arith.extui %9 : i1 to i32
    %c0_i32_9 = arith.constant 0 : i32
    %11 = arith.cmpi ne, %10, %c0_i32_9 : i32
    scf.if %11 {
      %c0_10 = arith.constant 0 : index
      %c0_11 = arith.constant 0 : index
      %12 = vector.load %arg7[%c0_10, %c0_11] : memref<64x128xf32, #tpu.memory_space<vmem>>, vector<64x128xf32>
      %c0_12 = arith.constant 0 : index
      %c0_13 = arith.constant 0 : index
      %13 = vector.load %arg5[%c0_12, %c0_13] : memref<1x128xf32, #tpu.memory_space<vmem>>, vector<1x128xf32>
      %14 = vector.broadcast %13 : vector<1x128xf32> to vector<64x128xf32>
      %15 = arith.addf %12, %14 : vector<64x128xf32>
      %c0_14 = arith.constant 0 : index
      %c0_15 = arith.constant 0 : index
      %16 = vector.load %arg6[%c0_14, %c0_15] : memref<64x128xf32, #tpu.memory_space<vmem>>, vector<64x128xf32>
      tpu.vector_store %arg6[%c0_14, %c0_15], %15 {strides = array<i32>} : memref<64x128xf32, #tpu.memory_space<vmem>>, vector<64x128xf32>,
    } else {
    }
    return
  }
  func.func @transform_0(%arg0: i32, %arg1: i32, %arg2: i32) -> (i32, i32) {
    %c0_i32 = arith.constant 0 : i32
    return %arg0, %arg2 : i32, i32
  }
  func.func @transform_1(%arg0: i32, %arg1: i32, %arg2: i32) -> (i32, i32) {
    %c0_i32 = arith.constant 0 : i32
    return %arg2, %arg1 : i32, i32
  }
  func.func @transform_2(%arg0: i32, %arg1: i32, %arg2: i32) -> (i32, i32) {
    %c0_i32 = arith.constant 0 : i32
    %c0_i32_0 = arith.constant 0 : i32
    return %c0_i32, %arg1 : i32, i32
  }
  func.func @transform_3(%arg0: i32, %arg1: i32, %arg2: i32) -> (i32, i32) {
    %c0_i32 = arith.constant 0 : i32
    return %arg0, %arg1 : i32, i32
  }
}

</mosaic_0001>

<llo_original>
// kernel: tpu_custom_call.1
$region0: #{tpu_custom_call.1}
  #allocation0 [shape = 'u32[]', space=smem, size = 0x4, offset = 0x4, fixed_abs, tag = 'smem constant byte address 0x4 - core index']
  #allocation1 [shape = 'u32[144,128]{1,0:T(1,128)}', space=vmem, size = 0x12000, scoped, tag = 'internal scratch']
  #allocation2 [shape = 'f32[64,128]{1,0:T(8,128)}', space=vmem, size = 0x8000, scoped, tag = 'scratch operand']
  %s0 = inlined_call_operand.hbm [shape: f32[64,128], index: 0, kind: input, shape index: {}]
  %s1 = inlined_call_operand.hbm [shape: f32[128,128], index: 1, kind: input, shape index: {}]
  %s2 = inlined_call_operand.vmem [shape: f32[1,128], index: 2, kind: input, shape index: {}]
  %s3 = inlined_call_operand.hbm [shape: f32[64,128], index: 3, kind: output, shape index: {}]
  %s4 = sld [smem:[#allocation0]]
  $region38: #{tpu_custom_call.1} parent=0
    _
  %s6 = ssub.s32 1, %s4
  %s7 = scalar_select 0, %s6, %s4
  $region1: #{tpu_custom_call.1} parent=0
    #allocation3 [shape = 'u8[32768]{0}', space=vmem, size = 0x8000, scoped, tag = 'input window, operand 0, single buffered']
    #allocation4 [shape = 's32[1]{0}', space=sflag, size = 0x4, scoped, tag = 'scoped memory for tpu_custom_call.1']
    #allocation5 [shape = 's32[1]{0}', space=sflag, size = 0x4, scoped, tag = 'scoped memory for tpu_custom_call.1']
    #allocation6 [shape = 'u8[65536]{0}', space=vmem, size = 0x10000, scoped, tag = 'input window, operand 1, single buffered']
    #allocation7 [shape = 's32[1]{0}', space=sflag, size = 0x4, scoped, tag = 'scoped memory for tpu_custom_call.1']
    #allocation8 [shape = 'u8[32768]{0}', space=vmem, size = 0x8000, scoped, tag = 'output window, operand 0, single buffered']
    %8 = vsyncpa [#allocation4], 0
    %9 = vsyncpa [#allocation7], 0
    %10 = vsyncpa [#allocation5], 0
    // Predicated region
    $region2: #{tpu_custom_call.1} parent=1 // pred_check
      _
    $region3: #{tpu_custom_call.1} parent=1 // pred_check_branch
      %12 = sbr.rel (0) target = $region5
    $region4: #{tpu_custom_call.1} parent=1 // pred_region
      %s14 = ssub.s32 1024, 1024
      %15 = vsyncadd [#allocation4], %s14
      %s16 = sshll.u32 [#allocation3], 4
      %s17 = int_to_ptr.vmem [resolvable:$true] %s16
      %22 = dma.hbm_to_vmem [thread:$0]  %s0, 1024, %s17, [#allocation4], 128, 128, 8
    $region5: #{tpu_custom_call.1} parent=1 // pred_fallthru
      _
    // Predicated region
    $region6: #{tpu_custom_call.1} parent=1 // pred_check
      _
    $region7: #{tpu_custom_call.1} parent=1 // pred_check_branch
      %24 = sbr.rel (0) target = $region9
    $region8: #{tpu_custom_call.1} parent=1 // pred_region
      %s26 = ssub.s32 2048, 2048
      %27 = vsyncadd [#allocation7], %s26
      %s28 = sshll.u32 [#allocation6], 4
      %s29 = int_to_ptr.vmem [resolvable:$true] %s28
      %34 = dma.hbm_to_vmem [thread:$0]  %s1, 2048, %s29, [#allocation7], 128, 128, 8
    $region9: #{tpu_custom_call.1} parent=1 // pred_fallthru
      _
    // Predicated region
    $region10: #{tpu_custom_call.1} parent=1 // pred_check
      _
    $region11: #{tpu_custom_call.1} parent=1 // pred_check_branch
      %36 = sbr.rel (0) target = $region13
    $region12: #{tpu_custom_call.1} parent=1 // pred_region
      _
    $region13: #{tpu_custom_call.1} parent=1 // pred_fallthru
      _
    // Predicated region
    $region14: #{tpu_custom_call.1} parent=1 // pred_check
      _
    $region15: #{tpu_custom_call.1} parent=1 // pred_check_branch
      %38 = sbr.rel (0) target = $region17
    $region16: #{tpu_custom_call.1} parent=1 // pred_region
      %39 = dma.done [#allocation4], 1024
    $region17: #{tpu_custom_call.1} parent=1 // pred_fallthru
      _
    // Predicated region
    $region18: #{tpu_custom_call.1} parent=1 // pred_check
      _
    $region19: #{tpu_custom_call.1} parent=1 // pred_check_branch
      %41 = sbr.rel (0) target = $region21
    $region20: #{tpu_custom_call.1} parent=1 // pred_region
      %42 = dma.done [#allocation7], 2048
    $region21: #{tpu_custom_call.1} parent=1 // pred_fallthru
      _
    %p43 = scmp.eq.s32.totalorder 0, 0
    // Predicated region
    $region22: #{tpu_custom_call.1} parent=1 // pred_check
      %p44 = pneg %p43
    $region23: #{tpu_custom_call.1} parent=1 // pred_check_branch
      %46 = sbr.rel (%p44) target = $region25
    $region24: #{tpu_custom_call.1} parent=1 // pred_region
      %47 = vst [vmem:[#allocation2] sm:$0xff] 0.0
      %48 = vst [vmem:[#allocation2 + $0x8] sm:$0xff] 0.0
      %49 = vst [vmem:[#allocation2 + $0x10] sm:$0xff] 0.0
      %50 = vst [vmem:[#allocation2 + $0x18] sm:$0xff] 0.0
      %51 = vst [vmem:[#allocation2 + $0x20] sm:$0xff] 0.0
      %52 = vst [vmem:[#allocation2 + $0x28] sm:$0xff] 0.0
      %53 = vst [vmem:[#allocation2 + $0x30] sm:$0xff] 0.0
      %54 = vst [vmem:[#allocation2 + $0x38] sm:$0xff] 0.0
    $region25: #{tpu_custom_call.1} parent=1 // pred_fallthru
      _
    %v55 = vld [vmem:[#allocation2] sm:$0xff]
    %v56 = vld [vmem:[#allocation2 + $0x8] sm:$0xff]
    %v57 = vld [vmem:[#allocation2 + $0x10] sm:$0xff]
    %v58 = vld [vmem:[#allocation2 + $0x18] sm:$0xff]
    %v59 = vld [vmem:[#allocation2 + $0x20] sm:$0xff]
    %v60 = vld [vmem:[#allocation2 + $0x28] sm:$0xff]
    %v61 = vld [vmem:[#allocation2 + $0x30] sm:$0xff]
    %v62 = vld [vmem:[#allocation2 + $0x38] sm:$0xff]
    %v63 = vld [vmem:[#allocation3] sm:$0xff]
    %v64 = vld [vmem:[#allocation3 + $0x8] sm:$0xff]
    %v65 = vld [vmem:[#allocation3 + $0x10] sm:$0xff]
    %v66 = vld [vmem:[#allocation3 + $0x18] sm:$0xff]
    %v67 = vld [vmem:[#allocation3 + $0x20] sm:$0xff]
    %v68 = vld [vmem:[#allocation3 + $0x28] sm:$0xff]
    %v69 = vld [vmem:[#allocation3 + $0x30] sm:$0xff]
    %v70 = vld [vmem:[#allocation3 + $0x38] sm:$0xff]
    %v71 = vld [vmem:[#allocation6] sm:$0xff]
    %v72 = vld [vmem:[#allocation6 + $0x8] sm:$0xff]
    %v73 = vld [vmem:[#allocation6 + $0x10] sm:$0xff]
    %v74 = vld [vmem:[#allocation6 + $0x18] sm:$0xff]
    %v75 = vld [vmem:[#allocation6 + $0x20] sm:$0xff]
    %v76 = vld [vmem:[#allocation6 + $0x28] sm:$0xff]
    %v77 = vld [vmem:[#allocation6 + $0x30] sm:$0xff]
    %v78 = vld [vmem:[#allocation6 + $0x38] sm:$0xff]
    %v79 = vld [vmem:[#allocation6 + $0x40] sm:$0xff]
    %v80 = vld [vmem:[#allocation6 + $0x48] sm:$0xff]
    %v81 = vld [vmem:[#allocation6 + $0x50] sm:$0xff]
    %v82 = vld [vmem:[#allocation6 + $0x58] sm:$0xff]
    %v83 = vld [vmem:[#allocation6 + $0x60] sm:$0xff]
    %v84 = vld [vmem:[#allocation6 + $0x68] sm:$0xff]
    %v85 = vld [vmem:[#allocation6 + $0x70] sm:$0xff]
    %v86 = vld [vmem:[#allocation6 + $0x78] sm:$0xff]
    %87 = vmatprep.subr.mxu0 0.0
    %88 = vmatpush1.msra.mxu0 %v86
    %89 = vmatprep.subr.mxu0 0.0
    %90 = vmatpush1.msra.mxu0 %v85
    %91 = vmatprep.subr.mxu0 0.0
    %92 = vmatpush1.msra.mxu0 %v84
    %93 = vmatprep.subr.mxu0 0.0
    %94 = vmatpush1.msra.mxu0 %v83
    %95 = vmatprep.subr.mxu0 0.0
    %96 = vmatpush1.msra.mxu0 %v82
    %97 = vmatprep.subr.mxu0 0.0
    %98 = vmatpush1.msra.mxu0 %v81
    %99 = vmatprep.subr.mxu0 0.0
    %100 = vmatpush1.msra.mxu0 %v80
    %101 = vmatprep.subr.mxu0 0.0
    %102 = vmatpush1.msra.mxu0 %v79
    %103 = vmatprep.subr.mxu0 0.0
    %104 = vmatpush1.msra.mxu0 %v78
    %105 = vmatprep.subr.mxu0 0.0
    %106 = vmatpush1.msra.mxu0 %v77
    %107 = vmatprep.subr.mxu0 0.0
    %108 = vmatpush1.msra.mxu0 %v76
    %109 = vmatprep.subr.mxu0 0.0
    %110 = vmatpush1.msra.mxu0 %v75
    %111 = vmatprep.subr.mxu0 0.0
    %112 = vmatpush1.msra.mxu0 %v74
    %113 = vmatprep.subr.mxu0 0.0
    %114 = vmatpush1.msra.mxu0 %v73
    %115 = vmatprep.subr.mxu0 0.0
    %116 = vmatpush1.msra.mxu0 %v72
    %117 = vmatprep.subr.mxu0 0.0
    %118 = vmatpush1.msra.mxu0 %v71
    %119 = vmatprep.subr.mxu0 0.0
    %120 = vmatpush2.msra.mxu0 0.0
    %121 = vmatprep.subr.mxu0 0.0
    %122 = vmatpush2.msra.mxu0 0.0
    %123 = vmatprep.subr.mxu0 0.0
    %124 = vmatpush2.msra.mxu0 0.0
    %125 = vmatprep.subr.mxu0 0.0
    %126 = vmatpush2.msra.mxu0 0.0
    %127 = vmatprep.subr.mxu0 0.0
    %128 = vmatpush2.msra.mxu0 0.0
    %129 = vmatprep.subr.mxu0 0.0
    %130 = vmatpush2.msra.mxu0 0.0
    %131 = vmatprep.subr.mxu0 0.0
    %132 = vmatpush2.msra.mxu0 0.0
    %133 = vmatprep.subr.mxu0 0.0
    %134 = vmatpush2.msra.mxu0 0.0
    %135 = vmatprep.subr.mxu0 0.0
    %136 = vmatpush2.msra.mxu0 0.0
    %137 = vmatprep.subr.mxu0 0.0
    %138 = vmatpush2.msra.mxu0 0.0
    %139 = vmatprep.subr.mxu0 0.0
    %140 = vmatpush2.msra.mxu0 0.0
    %141 = vmatprep.subr.mxu0 0.0
    %142 = vmatpush2.msra.mxu0 0.0
    %143 = vmatprep.subr.mxu0 0.0
    %144 = vmatpush2.msra.mxu0 0.0
    %145 = vmatprep.subr.mxu0 0.0
    %146 = vmatpush2.msra.mxu0 0.0
    %147 = vmatprep.subr.mxu0 0.0
    %148 = vmatpush2.msra.mxu0 0.0
    %149 = vmatprep.subr.mxu0 0.0
    %150 = vmatpush2.msra.mxu0 0.0
    %151 = vmatprep.mubr.f32.mxu0 0.0
    %152 = vmatmul.mubr.f32.gmra.mxu0 %v63
    %v153 = vpop.f32.mrf.mxu0
    %v154 = vadd.f32 0.0, %v153
    %v155 = vpop.f32.mrf.mxu0
    %156 = vmatprep.mubr.f32.mxu0 0.0
    %157 = vmatmul.mubr.f32.gmra.mxu0 %v64
    %v158 = vpop.f32.mrf.mxu0
    %v159 = vadd.f32 0.0, %v158
    %v160 = vpop.f32.mrf.mxu0
    %161 = vmatprep.mubr.f32.mxu0 0.0
    %162 = vmatmul.mubr.f32.gmra.mxu0 %v65
    %v163 = vpop.f32.mrf.mxu0
    %v164 = vadd.f32 0.0, %v163
    %v165 = vpop.f32.mrf.mxu0
    %166 = vmatprep.mubr.f32.mxu0 0.0
    %167 = vmatmul.mubr.f32.gmra.mxu0 %v66
    %v168 = vpop.f32.mrf.mxu0
    %v169 = vadd.f32 0.0, %v168
    %v170 = vpop.f32.mrf.mxu0
    %171 = vmatprep.mubr.f32.mxu0 0.0
    %172 = vmatmul.mubr.f32.gmra.mxu0 %v67
    %v173 = vpop.f32.mrf.mxu0
    %v174 = vadd.f32 0.0, %v173
    %v175 = vpop.f32.mrf.mxu0
    %176 = vmatprep.mubr.f32.mxu0 0.0
    %177 = vmatmul.mubr.f32.gmra.mxu0 %v68
    %v178 = vpop.f32.mrf.mxu0
    %v179 = vadd.f32 0.0, %v178
    %v180 = vpop.f32.mrf.mxu0
    %181 = vmatprep.mubr.f32.mxu0 0.0
    %182 = vmatmul.mubr.f32.gmra.mxu0 %v69
    %v183 = vpop.f32.mrf.mxu0
    %v184 = vadd.f32 0.0, %v183
    %v185 = vpop.f32.mrf.mxu0
    %186 = vmatprep.mubr.f32.mxu0 0.0
    %187 = vmatmul.mubr.f32.gmra.mxu0 %v70
    %v188 = vpop.f32.mrf.mxu0
    %v189 = vadd.f32 0.0, %v188
    %v190 = vpop.f32.mrf.mxu0
    %191 = vdwg.mxu0
    %v192 = vadd.f32 %v55, %v154
    %v193 = vadd.f32 %v56, %v159
    %v194 = vadd.f32 %v57, %v164
    %v195 = vadd.f32 %v58, %v169
    %v196 = vadd.f32 %v59, %v174
    %v197 = vadd.f32 %v60, %v179
    %v198 = vadd.f32 %v61, %v184
    %v199 = vadd.f32 %v62, %v189
    %200 = vst [vmem:[#allocation2] sm:$0xff] %v192
    %201 = vst [vmem:[#allocation2 + $0x8] sm:$0xff] %v193
    %202 = vst [vmem:[#allocation2 + $0x10] sm:$0xff] %v194
    %203 = vst [vmem:[#allocation2 + $0x18] sm:$0xff] %v195
    %204 = vst [vmem:[#allocation2 + $0x20] sm:$0xff] %v196
    %205 = vst [vmem:[#allocation2 + $0x28] sm:$0xff] %v197
    %206 = vst [vmem:[#allocation2 + $0x30] sm:$0xff] %v198
    %207 = vst [vmem:[#allocation2 + $0x38] sm:$0xff] %v199
    // Predicated region
    $region26: #{tpu_custom_call.1} parent=1 // pred_check
      %p208 = pneg %p43
    $region27: #{tpu_custom_call.1} parent=1 // pred_check_branch
      %210 = sbr.rel (%p208) target = $region29
    $region28: #{tpu_custom_call.1} parent=1 // pred_region
      %v211 = vld [vmem:[#allocation2] sm:$0xff]
      %v212 = vld [vmem:[#allocation2 + $0x8] sm:$0xff]
      %v213 = vld [vmem:[#allocation2 + $0x10] sm:$0xff]
      %v214 = vld [vmem:[#allocation2 + $0x18] sm:$0xff]
      %v215 = vld [vmem:[#allocation2 + $0x20] sm:$0xff]
      %v216 = vld [vmem:[#allocation2 + $0x28] sm:$0xff]
      %v217 = vld [vmem:[#allocation2 + $0x30] sm:$0xff]
      %v218 = vld [vmem:[#allocation2 + $0x38] sm:$0xff]
      %v219 = vld [vmem:[%s2] sm:$0x1]
      %v221 = vlaneseq
      %v222 = vshrl.u32 %v221, 7
      %v223 = vsub.s32 0, %v222
      %v224 = vrot.slane %v219, %v223
      %v226 = vadd.f32 %v211, %v224
      %v227 = vadd.f32 %v212, %v224
      %v228 = vadd.f32 %v213, %v224
      %v229 = vadd.f32 %v214, %v224
      %v230 = vadd.f32 %v215, %v224
      %v231 = vadd.f32 %v216, %v224
      %v232 = vadd.f32 %v217, %v224
      %v233 = vadd.f32 %v218, %v224
      %234 = vst [vmem:[#allocation8] sm:$0xff] %v226
      %235 = vst [vmem:[#allocation8 + $0x8] sm:$0xff] %v227
      %236 = vst [vmem:[#allocation8 + $0x10] sm:$0xff] %v228
      %237 = vst [vmem:[#allocation8 + $0x18] sm:$0xff] %v229
      %238 = vst [vmem:[#allocation8 + $0x20] sm:$0xff] %v230
      %239 = vst [vmem:[#allocation8 + $0x28] sm:$0xff] %v231
      %240 = vst [vmem:[#allocation8 + $0x30] sm:$0xff] %v232
      %241 = vst [vmem:[#allocation8 + $0x38] sm:$0xff] %v233
    $region29: #{tpu_custom_call.1} parent=1 // pred_fallthru
      _
    // Predicated region
    $region30: #{tpu_custom_call.1} parent=1 // pred_check
      _
    $region31: #{tpu_custom_call.1} parent=1 // pred_check_branch
      %243 = sbr.rel (0) target = $region33
    $region32: #{tpu_custom_call.1} parent=1 // pred_region
      %s245 = ssub.s32 1024, 1024
      %246 = vsyncadd [#allocation5], %s245
      %s247 = sshll.u32 [#allocation8], 4
      %s248 = int_to_ptr.vmem [resolvable:$true] %s247
      %253 = dma.vmem_to_hbm [thread:$0]  %s248, 1024, %s3, [#allocation5], 128, 128, 8
    $region33: #{tpu_custom_call.1} parent=1 // pred_fallthru
      _
    // Predicated region
    $region34: #{tpu_custom_call.1} parent=1 // pred_check
      _
    $region35: #{tpu_custom_call.1} parent=1 // pred_check_branch
      %255 = sbr.rel (0) target = $region37
    $region36: #{tpu_custom_call.1} parent=1 // pred_region
      %256 = dma.done [#allocation5], 1024
    $region37: #{tpu_custom_call.1} parent=1 // pred_fallthru
      _
    %257 = vsyncpa [#allocation4], 1
    %258 = vsyncpa [#allocation7], 1
    %259 = vsyncpa [#allocation5], 1

</llo_original>
